<compile_context>
chip_gen: v6e
topology: v6e:2x2x1
jax: 0.10.0
libtpu: 0.0.40
codegen_flags: <defaults>
</compile_context>

<pallas_src>
import functools

import jax
import jax.numpy as jnp
from jax import lax
from jax.experimental import pallas as pl
from jax.experimental.pallas import tpu as pltpu

DEFAULT_EPS = 1e-6


def _gem_kernel(p_ref, x_ref, o_ref, acc_ref, *,
                eps, hw_total, tile_hw, mask_hw, compute_dtype):
    """One (row-tile, hw-chunk) grid step.

    p_ref  : (1,) learnable exponent in SMEM
    x_ref  : (tile_nc, tile_hw) input tile in VMEM (native dtype)
    o_ref  : (tile_nc, 1) output tile in VMEM (written on the last hw chunk)
    acc_ref: (tile_nc, 1) f32 running sum of x**p over H*W
    """
    j = pl.program_id(1)

    @pl.when(j == 0)
    def _init():
        acc_ref[...] = jnp.zeros_like(acc_ref)

    p = p_ref[0]                                   # f32 scalar from SMEM
    p_c = p.astype(compute_dtype)

    # Element-wise chain in the compute dtype (bf16 for bf16 inputs -> bf16
    # EUP on v6e/v7x; f32 otherwise).  Upcast happens in vregs, not in HBM.
    x = x_ref[...].astype(compute_dtype)
    x = jnp.maximum(x, eps)                        # clamp(min=eps); x > 0 now
    xp = jnp.exp(jnp.log(x) * p_c)                 # x ** p  (EUP: log + exp)

    xp = xp.astype(jnp.float32)                    # accumulate in f32
    if mask_hw:
        # Ragged last H*W chunk: zero out-of-range lanes before the reduce.
        lane = lax.broadcasted_iota(jnp.int32, xp.shape, 1)
        valid = (j * tile_hw + lane) < hw_total
        xp = jnp.where(valid, xp, 0.0)

    acc_ref[...] += jnp.sum(xp, axis=-1, keepdims=True)

    @pl.when(j == pl.num_programs(1) - 1)
    def _finalize():
        inv_p = 1.0 / p.astype(jnp.float32)
        mean = acc_ref[...] * (1.0 / hw_total)     # avg_pool2d over full (H, W)
        o_ref[...] = jnp.exp(jnp.log(mean) * inv_p).astype(o_ref.dtype)


def _vmem_capacity_bytes():
    """Physical VMEM for this generation (64 MiB v7x, 128 MiB v5e/v6e)."""
    try:
        return int(pltpu.get_tpu_info().vmem_capacity_bytes)
    except Exception:
        return 64 * 1024 * 1024                    # conservative fallback (v7x)


def _round_up(x, m):
    return (x + m - 1) // m * m


def _choose_tiles(nc, hw, itemsize, work_budget_bytes):
    """Pick (tile_nc, tile_hw) so live VMEM per grid step stays in budget.

    Live VMEM per tile element ~= 2 * itemsize (double-buffered native input)
    plus ~4 concurrent f32 temporaries of the same logical size from the
    clamp/log/exp chain.
    """
    per_elem = 2 * itemsize + 4 * 4
    max_elems = max(8 * 128, work_budget_bytes // per_elem)

    padded_hw = _round_up(hw, 128)                 # lanes pad to 128
    nc_cap = _round_up(nc, 8)

    if 8 * padded_hw <= max_elems:
        # Full H*W per block (block last dim == full array dim).  Pick the
        # biggest row tile that fits, but keep >= ~8 row tiles when N*C
        # allows, for pipelining depth and v7x megacore sharding.
        tile_hw = hw
        tile_nc = (max_elems // padded_hw) // 8 * 8
        steps_target = _round_up(pl.cdiv(nc, 8), 8)
        tile_nc = max(8, min(tile_nc, nc_cap, max(8, steps_target)))
    else:
        # Very large H*W: also block the reduction axis (multiple of 128).
        tile_nc = 8
        tile_hw = max(128, (max_elems // 8) // 128 * 128)
        tile_hw = min(tile_hw, padded_hw)
    return tile_nc, tile_hw


def gem(x, p, eps=DEFAULT_EPS):
    """x: (N, C, H, W) float array, p: learnable exponent. Returns (N, C, 1, 1)."""
    N, C, H, W = x.shape
    NC, HW = N * C, H * W
    x2d = x.reshape(NC, HW)                        # free row-major collapse
    p = jnp.asarray(p, jnp.float32).reshape(1)     # robust to () or (1,) params

    vmem_cap = _vmem_capacity_bytes()
    vmem_limit = int(min((vmem_cap * 3) // 4, 100 * 1024 * 1024))
    tile_nc, tile_hw = _choose_tiles(NC, HW, x.dtype.itemsize, vmem_limit // 2)

    n_row = pl.cdiv(NC, tile_nc)                   # ragged last block OK
    n_hw = pl.cdiv(HW, tile_hw)
    mask_hw = (n_hw > 1) and (HW % tile_hw != 0)

    compute_dtype = jnp.bfloat16 if x.dtype == jnp.bfloat16 else jnp.float32

    kernel = functools.partial(
        _gem_kernel,
        eps=float(eps),
        hw_total=HW,
        tile_hw=tile_hw,
        mask_hw=mask_hw,
        compute_dtype=compute_dtype,
    )

    out2d = pl.pallas_call(
        kernel,
        out_shape=jax.ShapeDtypeStruct((NC, 1), x.dtype),
        grid=(n_row, n_hw),
        in_specs=[
            pl.BlockSpec(memory_space=pltpu.SMEM),                   # p (scalar)
            pl.BlockSpec((tile_nc, tile_hw), lambda i, j: (i, j)),   # x tile
        ],
        out_specs=pl.BlockSpec((tile_nc, 1), lambda i, j: (i, 0)),
        scratch_shapes=[pltpu.VMEM((tile_nc, 1), jnp.float32)],      # f32 acc
        compiler_params=pltpu.CompilerParams(
            dimension_semantics=("parallel", "arbitrary"),
            vmem_limit_bytes=vmem_limit,
        ),
        cost_estimate=pl.CostEstimate(
            flops=4 * NC * HW,
            transcendentals=2 * NC * HW + 2 * NC,
            bytes_accessed=int(NC * HW * x.dtype.itemsize
                               + NC * x.dtype.itemsize + 4),
        ),
    )(p, x2d)

    return out2d.reshape(N, C, 1, 1)


def gem_reference(x, p, eps=DEFAULT_EPS):
    xp = jnp.maximum(x.astype(jnp.float32), eps) ** p[0]
    m = jnp.mean(xp, axis=(2, 3), keepdims=True)
    return (m ** (1.0 / p[0])).astype(x.dtype)


if __name__ == "__main__":
    key = jax.random.PRNGKey(0)
    N, C, H, W = 2, 4, 16, 16
    x = jax.random.normal(key, (N, C, H, W), dtype=jnp.float32)

    # Deterministic parameter init (matches GeM.__init__: p = ones(1) * 3)
    p = jnp.ones((1,), dtype=jnp.float32) * 3.0

    out = gem(x, p)
    jax.block_until_ready(out)

    ref = gem_reference(x, p)
    assert out.shape == (N, C, 1, 1)
    assert jnp.allclose(out, ref, rtol=1e-4, atol=1e-5), (out, ref)

    print("KERNEL_OK")
</pallas_src>

<mosaic_0001>
module attributes {stable_mosaic.version = 11 : i64} {
  func.func @_gem_kernel(%arg0: i32, %arg1: i32, %arg2: memref<1xf32, #tpu.memory_space<smem>>, %arg3: memref<8x256xf32, #tpu.memory_space<vmem>>, %arg4: memref<8x1xf32, #tpu.memory_space<vmem>>, %arg5: memref<8x1xf32, #tpu.memory_space<vmem>>) attributes {dimension_semantics = [#tpu.dimension_semantics<parallel>, #tpu.dimension_semantics<arbitrary>], iteration_bounds = array<i64: 1, 1>, scalar_prefetch = 0 : i64, scratch_operands = 1 : i64, tpu.core_type = #tpu.core_type<tc>, window_params = [{transform_indices = @transform_0, window_bounds = array<i64: 1>}, {transform_indices = @transform_1, window_bounds = array<i64: 8, 256>}, {transform_indices = @transform_2, window_bounds = array<i64: 8, 1>}]} {
    %c0_i32 = arith.constant 0 : i32
    %0 = arith.cmpi eq, %arg1, %c0_i32 : i32
    %1 = arith.extui %0 : i1 to i32
    %c0_i32_0 = arith.constant 0 : i32
    %2 = arith.cmpi ne, %1, %c0_i32_0 : i32
    scf.if %2 {
      %cst_10 = arith.constant 0.000000e+00 : f32
      %19 = vector.broadcast %cst_10 : f32 to vector<8x1xf32>
      %c0_11 = arith.constant 0 : index
      %c0_12 = arith.constant 0 : index
      %20 = vector.load %arg5[%c0_11, %c0_12] : memref<8x1xf32, #tpu.memory_space<vmem>>, vector<8x1xf32>
      tpu.vector_store %arg5[%c0_11, %c0_12], %19 {strides = array<i32>} : memref<8x1xf32, #tpu.memory_space<vmem>>, vector<8x1xf32>,
    } else {
    }
    %c0 = arith.constant 0 : index
    %3 = memref.load %arg2[%c0] : memref<1xf32, #tpu.memory_space<smem>>
    %c0_1 = arith.constant 0 : index
    %c0_2 = arith.constant 0 : index
    %4 = vector.load %arg3[%c0_1, %c0_2] : memref<8x256xf32, #tpu.memory_space<vmem>>, vector<8x256xf32>
    %cst = arith.constant 9.99999997E-7 : f32
    %5 = vector.broadcast %cst : f32 to vector<8x256xf32>
    %6 = arith.maximumf %4, %5 : vector<8x256xf32>
    %7 = math.log %6 : vector<8x256xf32>
    %8 = vector.broadcast %3 : f32 to vector<8x256xf32>
    %9 = arith.mulf %7, %8 : vector<8x256xf32>
    %10 = math.exp %9 : vector<8x256xf32>
    %c0_3 = arith.constant 0 : index
    %c0_4 = arith.constant 0 : index
    %11 = vector.load %arg5[%c0_3, %c0_4] : memref<8x1xf32, #tpu.memory_space<vmem>>, vector<8x1xf32>
    %cst_5 = arith.constant dense<0.000000e+00> : vector<8xf32>
    %12 = vector.multi_reduction <add>, %10, %cst_5 [1] : vector<8x256xf32> to vector<8xf32>
    %13 = vector.shape_cast %12 : vector<8xf32> to vector<8x1xf32>
    %14 = arith.addf %11, %13 : vector<8x1xf32>
    %c0_6 = arith.constant 0 : index
    %c0_7 = arith.constant 0 : index
    %15 = vector.load %arg5[%c0_6, %c0_7] : memref<8x1xf32, #tpu.memory_space<vmem>>, vector<8x1xf32>
    tpu.vector_store %arg5[%c0_6, %c0_7], %14 {strides = array<i32>} : memref<8x1xf32, #tpu.memory_space<vmem>>, vector<8x1xf32>,
    %c0_i32_8 = arith.constant 0 : i32
    %16 = arith.cmpi eq, %arg1, %c0_i32_8 : i32
    %17 = arith.extui %16 : i1 to i32
    %c0_i32_9 = arith.constant 0 : i32
    %18 = arith.cmpi ne, %17, %c0_i32_9 : i32
    scf.if %18 {
      %cst_10 = arith.constant 1.000000e+00 : f32
      %19 = arith.divf %cst_10, %3 : f32
      %c0_11 = arith.constant 0 : index
      %c0_12 = arith.constant 0 : index
      %20 = vector.load %arg5[%c0_11, %c0_12] : memref<8x1xf32, #tpu.memory_space<vmem>>, vector<8x1xf32>
      %cst_13 = arith.constant 3.906250e-03 : f32
      %21 = vector.broadcast %cst_13 : f32 to vector<8x1xf32>
      %22 = arith.mulf %20, %21 : vector<8x1xf32>
      %23 = math.log %22 : vector<8x1xf32>
      %24 = vector.broadcast %19 : f32 to vector<8x1xf32>
      %25 = arith.mulf %23, %24 : vector<8x1xf32>
      %26 = math.exp %25 : vector<8x1xf32>
      %c0_14 = arith.constant 0 : index
      %c0_15 = arith.constant 0 : index
      %27 = vector.load %arg4[%c0_14, %c0_15] : memref<8x1xf32, #tpu.memory_space<vmem>>, vector<8x1xf32>
      tpu.vector_store %arg4[%c0_14, %c0_15], %26 {strides = array<i32>} : memref<8x1xf32, #tpu.memory_space<vmem>>, vector<8x1xf32>,
    } else {
    }
    return
  }
  func.func @transform_0(%arg0: i32, %arg1: i32) -> i32 {
    %c0_i32 = arith.constant 0 : i32
    %c0_i32_0 = arith.constant 0 : i32
    return %c0_i32 : i32
  }
  func.func @transform_1(%arg0: i32, %arg1: i32) -> (i32, i32) {
    %c0_i32 = arith.constant 0 : i32
    return %arg0, %arg1 : i32, i32
  }
  func.func @transform_2(%arg0: i32, %arg1: i32) -> (i32, i32) {
    %c0_i32 = arith.constant 0 : i32
    %c0_i32_0 = arith.constant 0 : i32
    return %arg0, %c0_i32 : i32, i32
  }
}

</mosaic_0001>

<llo_original>
// kernel: tpu_custom_call.1
$region0: #{tpu_custom_call.1}
  #allocation0 [shape = 'u32[]', space=smem, size = 0x4, offset = 0x4, fixed_abs, tag = 'smem constant byte address 0x4 - core index']
  #allocation1 [shape = 'u32[144,128]{1,0:T(1,128)}', space=vmem, size = 0x12000, scoped, tag = 'internal scratch']
  #allocation2 [shape = 'f32[8,1]{1,0:T(8,128)}', space=vmem, size = 0x1000, scoped, tag = 'scratch operand']
  #allocation3 [shape = 'f32[1]{0:T(128)S(6)}', space=smem, size = 0x200, scoped, tag = 'scoped memory for tpu_custom_call.1']
  %s0 = inlined_call_operand.<no memory space> [shape: f32[1], index: 0, kind: input, shape index: {}]
  %s1 = inlined_call_operand.hbm [shape: f32[8,256], index: 1, kind: input, shape index: {}]
  %s2 = inlined_call_operand.vmem [shape: f32[8,1], index: 2, kind: output, shape index: {}]
  %s3 = sld [smem:[#allocation0]]
  $region30: #{tpu_custom_call.1} parent=0
    _
  %s5 = ssub.s32 1, %s3
  %s6 = scalar_select 0, %s5, %s3
  %7 = sst [smem:[#allocation3]] %s0
  $region1: #{tpu_custom_call.1} parent=0
    #allocation4 [shape = 'u8[8192]{0}', space=vmem, size = 0x2000, scoped, tag = 'input window, operand 1, single buffered']
    #allocation5 [shape = 's32[1]{0}', space=sflag, size = 0x4, scoped, tag = 'scoped memory for tpu_custom_call.1']
    %8 = vsyncpa [#allocation5], 0
    // Predicated region
    $region2: #{tpu_custom_call.1} parent=1 // pred_check
      _
    $region3: #{tpu_custom_call.1} parent=1 // pred_check_branch
      %10 = sbr.rel (0) target = $region5
    $region4: #{tpu_custom_call.1} parent=1 // pred_region
      _
    $region5: #{tpu_custom_call.1} parent=1 // pred_fallthru
      _
    // Predicated region
    $region6: #{tpu_custom_call.1} parent=1 // pred_check
      _
    $region7: #{tpu_custom_call.1} parent=1 // pred_check_branch
      %12 = sbr.rel (0) target = $region9
    $region8: #{tpu_custom_call.1} parent=1 // pred_region
      %s14 = ssub.s32 256, 256
      %15 = vsyncadd [#allocation5], %s14
      %s17 = sshll.u32 [#allocation4], 4
      %s18 = int_to_ptr.vmem [resolvable:$true] %s17
      %20 = dma.hbm_to_vmem [thread:$0]  %s1, 256, %s18, [#allocation5]
    $region9: #{tpu_custom_call.1} parent=1 // pred_fallthru
      _
    // Predicated region
    $region10: #{tpu_custom_call.1} parent=1 // pred_check
      _
    $region11: #{tpu_custom_call.1} parent=1 // pred_check_branch
      %22 = sbr.rel (0) target = $region13
    $region12: #{tpu_custom_call.1} parent=1 // pred_region
      %23 = dma.done [#allocation5], 256
    $region13: #{tpu_custom_call.1} parent=1 // pred_fallthru
      _
    %p24 = scmp.eq.s32.totalorder 0, 0
    // Predicated region
    $region14: #{tpu_custom_call.1} parent=1 // pred_check
      %p25 = pneg %p24
    $region15: #{tpu_custom_call.1} parent=1 // pred_check_branch
      %27 = sbr.rel (%p25) target = $region17
    $region16: #{tpu_custom_call.1} parent=1 // pred_region
      %vm28 = vcmask 7168
      %29 = vst.msk [vmem:[#allocation2] sm:$0xff] %vm28, 0.0
    $region17: #{tpu_custom_call.1} parent=1 // pred_fallthru
      _
    %s30 = sld [smem:[#allocation3]]
    %v31 = vld [vmem:[#allocation4] sm:$0xff]
    %v32 = vld [vmem:[#allocation4 + $0x8] sm:$0xff]
    %v33 = vmax.f32 %v31, 1e-06
    %v34 = vmax.f32 %v32, 1e-06
    %v35 = vlog2.pop %v33
    %v36 = vmul.f32 %v35, 0.6931472
    %v37 = vlog2.pop %v34
    %v38 = vmul.f32 %v37, 0.6931472
    %v39 = vstv %s30
    %v40 = vmul.f32 %v36, %v39
    %v41 = vmul.f32 %v38, %v39
    %v42 = vmul.f32 %v40, 1.442695
    %v43 = vpow.pop %v42
    %v44 = vmul.f32 %v41, 1.442695
    %v45 = vpow.pop %v44
    %v46 = vld [vmem:[#allocation2] sm:$0xff]
    %v47 = vadd.f32 %v43, %v45
    %48 = vadd.xlane.f32.xlu0 %v47
    %v49 = vpop.xlane.xlu0 %48
    %v50 = vadd.f32 %v46, %v49
    %vm51 = vcmask 7168
    %52 = vst.msk [vmem:[#allocation2] sm:$0xff] %vm51, %v50
    // Predicated region
    $region18: #{tpu_custom_call.1} parent=1 // pred_check
      %p53 = pneg %p24
    $region19: #{tpu_custom_call.1} parent=1 // pred_check_branch
      %55 = sbr.rel (%p53) target = $region21
    $region20: #{tpu_custom_call.1} parent=1 // pred_region
      %v56 = vstv %s30
      %v57 = vrcp.pop %v56
      %s58 = vtos %v57
      %v59 = vld [vmem:[#allocation2] sm:$0xff]
      %v60 = vmul.f32 %v59, 0.00390625
      %v61 = vlog2.pop %v60
      %v62 = vmul.f32 %v61, 0.6931472
      %v63 = vstv %s58
      %v64 = vmul.f32 %v62, %v63
      %v65 = vmul.f32 %v64, 1.442695
      %v66 = vpow.pop %v65
      %67 = vst.msk [vmem:[%s2] sm:$0xff] %vm51, %v66
    $region21: #{tpu_custom_call.1} parent=1 // pred_fallthru
      _
    // Predicated region
    $region22: #{tpu_custom_call.1} parent=1 // pred_check
      _
    $region23: #{tpu_custom_call.1} parent=1 // pred_check_branch
      %69 = sbr.rel (0) target = $region25
    $region24: #{tpu_custom_call.1} parent=1 // pred_region
      _
    $region25: #{tpu_custom_call.1} parent=1 // pred_fallthru
      _
    // Predicated region
    $region26: #{tpu_custom_call.1} parent=1 // pred_check
      _
    $region27: #{tpu_custom_call.1} parent=1 // pred_check_branch
      %71 = sbr.rel (0) target = $region29
    $region28: #{tpu_custom_call.1} parent=1 // pred_region
      _
    $region29: #{tpu_custom_call.1} parent=1 // pred_fallthru
      _
    %72 = vsyncpa [#allocation5], 1

</llo_original>
